<compile_context>
chip_gen: v7x
topology: tpu7x:2x2x1
jax: 0.10.0
libtpu: 0.0.40
codegen_flags: <defaults>
</compile_context>

<pallas_src>
import functools

import jax
import jax.numpy as jnp
from jax.experimental import pallas as pl
from jax.experimental.pallas import tpu as pltpu

_EPS = 1e-5  # torch.nn.InstanceNorm2d default (affine=False, biased variance)


def _instance_norm(h, eps):
    """Per-row normalization over the last axis (two-pass, biased variance)."""
    mean = jnp.mean(h, axis=-1, keepdims=True)
    c = h - mean
    var = jnp.mean(c * c, axis=-1, keepdims=True)
    return c * jax.lax.rsqrt(var + eps)


def _instance_norm_per_sample(h, batch_tile, HW, eps):
    """h: (rows, batch_tile*HW). InstanceNorm per (row, sample) HW segment.
    Segment slices are lane-aligned whenever HW is a multiple of 128."""
    if batch_tile == 1:
        return _instance_norm(h, eps)
    segs = [_instance_norm(h[:, b * HW:(b + 1) * HW], eps) for b in range(batch_tile)]
    return jnp.concatenate(segs, axis=1)


def _resnet_block_kernel(x_ref, w1_ref, w2_ref, w3_ref, o_ref, *, H, W, batch_tile, eps):
    HW = H * W
    L = batch_tile * HW
    P = w1_ref.shape[0]

    x = x_ref[...]                                          # (C, L) f32 residual

    # ---- conv1x1 (dim -> planes); bias elided (cancelled by InstanceNorm) ----
    h = jnp.dot(w1_ref[...], x.astype(jnp.bfloat16),
                preferred_element_type=jnp.float32)         # (P, L)
    h = jnp.maximum(_instance_norm_per_sample(h, batch_tile, HW, eps), 0.0)

    # ---- conv3x3 (planes -> planes, padding=1) ----
    # 8 static lane-rolls of the whole slab + in-kernel boundary masks; the 9
    # per-tap channel mixes accumulate into one f32 (P, L) result, so no
    # (9P, L) stacked buffer is ever materialized.  Rolling across sample
    # boundaries is harmless: any pixel whose 3x3 source lies outside its own
    # image is masked to zero before the matmul.
    lane = jax.lax.broadcasted_iota(jnp.int32, (P, L), 1)
    if (W & (W - 1)) == 0 and (H & (H - 1)) == 0:           # power-of-two fast path
        xi = jnp.bitwise_and(lane, W - 1)
        yi = jnp.bitwise_and(jnp.right_shift(lane, W.bit_length() - 1), H - 1)
    else:
        # TODO(synk): verify vector int div/rem lowering on the target Mosaic
        # version; fall back to f32 floor-division if rejected.
        xi = lane % W
        yi = (lane // W) % H

    hb = h.astype(jnp.bfloat16)
    acc = jnp.dot(w2_ref[4], hb, preferred_element_type=jnp.float32)  # center tap
    for k in (0, 1, 2, 3, 5, 6, 7, 8):
        dy, dx = k // 3 - 1, k % 3 - 1
        off = dy * W + dx
        conds = []
        if dy == -1:
            conds.append(yi >= 1)
        elif dy == 1:
            conds.append(yi <= H - 2)
        if dx == -1:
            conds.append(xi >= 1)
        elif dx == 1:
            conds.append(xi <= W - 2)
        valid = functools.reduce(jnp.logical_and, conds)
        # TODO(synk): roll in bf16 once packed-dtype lane rotation is confirmed
        # on the target Mosaic build (halves XLU roll traffic at production P).
        tap = jnp.where(valid, pltpu.roll(h, shift=(-off) % L, axis=1), 0.0)
        acc = acc + jnp.dot(w2_ref[k], tap.astype(jnp.bfloat16),
                            preferred_element_type=jnp.float32)
    h = jnp.maximum(_instance_norm_per_sample(acc, batch_tile, HW, eps), 0.0)

    # ---- conv1x1 (planes -> dim); bias elided ----
    h = jnp.dot(w3_ref[...], h.astype(jnp.bfloat16),
                preferred_element_type=jnp.float32)         # (C, L)
    h = _instance_norm_per_sample(h, batch_tile, HW, eps)

    # ---- residual add + ReLU ----
    o_ref[...] = jnp.maximum(h + x, 0.0).astype(o_ref.dtype)


def _largest_divisor_leq(n, cap):
    for d in range(min(cap, n), 0, -1):
        if n % d == 0:
            return d
    return 1


def _pick_batch_tile(N, C, P, HW, *, vmem_budget_bytes=24 << 20, min_grid_steps=4):
    """Largest divisor of N whose per-step footprint fits the VMEM budget,
    preferring >= min_grid_steps grid steps (so BlockSpec double-buffering can
    overlap the DMA prologue and both v7x TensorCores get work) and an even
    grid length.  When N is large both goals are met with a big tile."""
    def footprint(bt):
        L = bt * HW
        io = 2 * (2 * C * L * 4)          # in + out blocks, double-buffered f32
        inter = 6 * P * L * 4             # h / taps / acc / masks (rough upper bound)
        return io + inter

    divisors = [d for d in range(1, N + 1) if N % d == 0]
    fitting = [d for d in divisors if footprint(d) <= vmem_budget_bytes] or [1]
    preferred = [d for d in fitting if N // d >= min_grid_steps] or fitting
    even = [d for d in preferred if (N // d) % 2 == 0]
    return max(even or preferred)


def resnet_block(x, params, *, eps=_EPS, batch_tile=None):
    """x: (N, C, H, W) float32 (NCHW, matching the PyTorch module)."""
    w1, _b1, w2, _b2, w3, _b3 = params   # biases cancel under InstanceNorm(affine=False)
    N, C, H, W = x.shape
    P = w2.shape[0]
    HW = H * W
    if batch_tile is None:
        batch_tile = _pick_batch_tile(N, C, P, HW)
    elif N % batch_tile != 0:
        batch_tile = _largest_divisor_leq(N, batch_tile)    # no silent fallback to 1
    L = batch_tile * HW

    # Layout plumbing (outside the kernel): channels -> sublanes, batch*spatial -> lanes.
    x2 = jnp.transpose(x.reshape(N, C, HW), (1, 0, 2)).reshape(C, N * HW)

    w1_m = w1.reshape(P, C).astype(jnp.bfloat16)                        # (planes, dim)
    w3_m = w3.reshape(C, P).astype(jnp.bfloat16)                        # (dim, planes)
    # (out, in, ky, kx) -> (ky, kx, out, in) -> (9, out, in): w2_m[k] is tap k's channel mix.
    w2_m = jnp.transpose(w2, (2, 3, 0, 1)).reshape(9, P, P).astype(jnp.bfloat16)

    flops = int(2 * N * HW * (C * P + 9 * P * P + P * C))
    bytes_accessed = int(x.size * 4 * 2 + (w1_m.size + w2_m.size + w3_m.size) * 2)
    cost = pl.CostEstimate(flops=flops,
                           transcendentals=int(N * (2 * P + C)),
                           bytes_accessed=bytes_accessed)

    out = pl.pallas_call(
        functools.partial(_resnet_block_kernel, H=H, W=W, batch_tile=batch_tile, eps=eps),
        out_shape=jax.ShapeDtypeStruct((C, N * HW), x.dtype),
        grid=(N // batch_tile,),
        in_specs=[
            pl.BlockSpec((C, L), lambda n: (0, n)),
            # Constant-index weight blocks.
            # TODO(synk): pipeline_mode=pl.Buffered(1) (or a one-shot scratch copy)
            # to drop their second VMEM buffer at production P on v7x/v5e.
            pl.BlockSpec((P, C), lambda n: (0, 0)),
            pl.BlockSpec((9, P, P), lambda n: (0, 0, 0)),
            pl.BlockSpec((C, P), lambda n: (0, 0)),
        ],
        out_specs=pl.BlockSpec((C, L), lambda n: (0, n)),
        compiler_params=pltpu.CompilerParams(
            # Batch axis is embarrassingly parallel (megacore-shardable).
            # TODO(synk): at production sizes set vmem_limit_bytes from the actual
            # per-step footprint (v5e scoped default 16 MiB, v7x physical 64 MiB)
            # and add a lane/HW tiling grid axis with halo handling for huge H*W.
            dimension_semantics=("parallel",)),
        cost_estimate=cost,
    )(x2, w1_m, w2_m, w3_m)

    return jnp.transpose(out.reshape(C, N, HW), (1, 0, 2)).reshape(N, C, H, W)


def _reference(x, params, eps=_EPS):
    """Pure-JAX reference mirroring the PyTorch forward (f32, highest precision)."""
    w1, b1, w2, b2, w3, b3 = params

    def conv(h, w, b, pad):
        y = jax.lax.conv_general_dilated(
            h, w, (1, 1), [(pad, pad), (pad, pad)],
            dimension_numbers=("NCHW", "OIHW", "NCHW"),
            precision=jax.lax.Precision.HIGHEST)
        return y + b[None, :, None, None]

    def inorm(h):
        m = h.mean(axis=(2, 3), keepdims=True)
        v = ((h - m) ** 2).mean(axis=(2, 3), keepdims=True)
        return (h - m) / jnp.sqrt(v + eps)

    h = jax.nn.relu(inorm(conv(x, w1, b1, 0)))
    h = jax.nn.relu(inorm(conv(h, w2, b2, 1)))
    h = inorm(conv(h, w3, b3, 0))
    return jax.nn.relu(h + x)


if __name__ == "__main__":
    dim, planes = 4, 8
    N, H, W = 4, 16, 16

    key = jax.random.PRNGKey(0)
    kx, k1, k2, k3, k4, k5, k6 = jax.random.split(key, 7)
    x = jax.random.normal(kx, (N, dim, H, W), jnp.float32)
    params = (
        jax.random.normal(k1, (planes, dim, 1, 1), jnp.float32) * 0.3,     # conv1 w
        jax.random.normal(k2, (planes,), jnp.float32) * 0.1,               # conv1 b
        jax.random.normal(k3, (planes, planes, 3, 3), jnp.float32) * 0.1,  # conv2 w
        jax.random.normal(k4, (planes,), jnp.float32) * 0.1,               # conv2 b
        jax.random.normal(k5, (dim, planes, 1, 1), jnp.float32) * 0.3,     # conv3 w
        jax.random.normal(k6, (dim,), jnp.float32) * 0.1,                  # conv3 b
    )

    out = jax.block_until_ready(resnet_block(x, params))
    ref = jax.block_until_ready(_reference(x, params))

    assert out.shape == x.shape
    err = float(jnp.max(jnp.abs(out - ref)))
    # Kernel uses bf16 MXU operands (f32 accumulation); reference is f32 HIGHEST.
    assert err < 1e-1, f"max abs error too large: {err}"
    print("KERNEL_OK")
</pallas_src>

<mosaic_0001>
module attributes {stable_mosaic.version = 11 : i64} {
  func.func @_resnet_block_kernel(%arg0: i32, %arg1: memref<4x256xf32, #tpu.memory_space<vmem>>, %arg2: memref<8x4xbf16, #tpu.memory_space<vmem>>, %arg3: memref<9x8x8xbf16, #tpu.memory_space<vmem>>, %arg4: memref<4x8xbf16, #tpu.memory_space<vmem>>, %arg5: memref<4x256xf32, #tpu.memory_space<vmem>>) attributes {dimension_semantics = [#tpu.dimension_semantics<parallel>], iteration_bounds = array<i64: 4>, scalar_prefetch = 0 : i64, scratch_operands = 0 : i64, tpu.core_type = #tpu.core_type<tc>, window_params = [{transform_indices = @transform_0, window_bounds = array<i64: 4, 256>}, {pipeline_mode = #tpu.pipeline_mode<synchronous>, transform_indices = @transform_1, window_bounds = array<i64: 8, 4>}, {pipeline_mode = #tpu.pipeline_mode<synchronous>, transform_indices = @transform_2, window_bounds = array<i64: 9, 8, 8>}, {pipeline_mode = #tpu.pipeline_mode<synchronous>, transform_indices = @transform_3, window_bounds = array<i64: 4, 8>}, {transform_indices = @transform_4, window_bounds = array<i64: 4, 256>}]} {
    %c0 = arith.constant 0 : index
    %c0_0 = arith.constant 0 : index
    %0 = vector.load %arg1[%c0, %c0_0] : memref<4x256xf32, #tpu.memory_space<vmem>>, vector<4x256xf32>
    %c0_1 = arith.constant 0 : index
    %c0_2 = arith.constant 0 : index
    %1 = vector.load %arg2[%c0_1, %c0_2] : memref<8x4xbf16, #tpu.memory_space<vmem>>, vector<8x4xbf16>
    %2 = arith.truncf %0 : vector<4x256xf32> to vector<4x256xbf16>
    %cst = arith.constant dense<0.000000e+00> : vector<8x256xf32>
    %3 = tpu.matmul %1, %2, %cst {dimension_numbers = #tpu.dot_dimension_numbers<[1], [0], [0], [1], [0, 0, 1, 1], [], []>} : vector<8x4xbf16>, vector<4x256xbf16>, vector<8x256xf32> -> vector<8x256xf32>
    %cst_3 = arith.constant dense<0.000000e+00> : vector<8xf32>
    %4 = vector.multi_reduction <add>, %3, %cst_3 [1] : vector<8x256xf32> to vector<8xf32>
    %5 = vector.shape_cast %4 : vector<8xf32> to vector<8x1xf32>
    %cst_4 = arith.constant 2.560000e+02 : f32
    %6 = vector.broadcast %cst_4 : f32 to vector<8x1xf32>
    %7 = arith.divf %5, %6 : vector<8x1xf32>
    %8 = vector.broadcast %7 : vector<8x1xf32> to vector<8x256xf32>
    %9 = arith.subf %3, %8 : vector<8x256xf32>
    %10 = arith.mulf %9, %9 : vector<8x256xf32>
    %cst_5 = arith.constant dense<0.000000e+00> : vector<8xf32>
    %11 = vector.multi_reduction <add>, %10, %cst_5 [1] : vector<8x256xf32> to vector<8xf32>
    %12 = vector.shape_cast %11 : vector<8xf32> to vector<8x1xf32>
    %cst_6 = arith.constant 2.560000e+02 : f32
    %13 = vector.broadcast %cst_6 : f32 to vector<8x1xf32>
    %14 = arith.divf %12, %13 : vector<8x1xf32>
    %cst_7 = arith.constant 9.99999974E-6 : f32
    %15 = vector.broadcast %cst_7 : f32 to vector<8x1xf32>
    %16 = arith.addf %14, %15 : vector<8x1xf32>
    %17 = math.rsqrt %16 : vector<8x1xf32>
    %18 = vector.broadcast %17 : vector<8x1xf32> to vector<8x256xf32>
    %19 = arith.mulf %9, %18 : vector<8x256xf32>
    %cst_8 = arith.constant 0.000000e+00 : f32
    %20 = vector.broadcast %cst_8 : f32 to vector<8x256xf32>
    %21 = arith.maximumf %19, %20 : vector<8x256xf32>
    %22 = tpu.iota {dimensions = array<i32: 1>} : vector<8x256xi32>
    %c15_i32 = arith.constant 15 : i32
    %23 = vector.broadcast %c15_i32 : i32 to vector<8x256xi32>
    %24 = arith.andi %22, %23 : vector<8x256xi32>
    %c4_i32 = arith.constant 4 : i32
    %25 = vector.broadcast %c4_i32 : i32 to vector<8x256xi32>
    %26 = arith.shrsi %22, %25 : vector<8x256xi32>
    %c15_i32_9 = arith.constant 15 : i32
    %27 = vector.broadcast %c15_i32_9 : i32 to vector<8x256xi32>
    %28 = arith.andi %26, %27 : vector<8x256xi32>
    %29 = arith.truncf %21 : vector<8x256xf32> to vector<8x256xbf16>
    %c4 = arith.constant 4 : index
    %c0_10 = arith.constant 0 : index
    %c0_11 = arith.constant 0 : index
    %30 = vector.load %arg3[%c4, %c0_10, %c0_11] : memref<9x8x8xbf16, #tpu.memory_space<vmem>>, vector<1x8x8xbf16>
    %31 = vector.shape_cast %30 : vector<1x8x8xbf16> to vector<8x8xbf16>
    %cst_12 = arith.constant dense<0.000000e+00> : vector<8x256xf32>
    %32 = tpu.matmul %31, %29, %cst_12 {dimension_numbers = #tpu.dot_dimension_numbers<[1], [0], [0], [1], [0, 0, 1, 1], [], []>} : vector<8x8xbf16>, vector<8x256xbf16>, vector<8x256xf32> -> vector<8x256xf32>
    %c1_i32 = arith.constant 1 : i32
    %33 = vector.broadcast %c1_i32 : i32 to vector<8x256xi32>
    %34 = arith.cmpi sge, %28, %33 : vector<8x256xi32>
    %c1_i32_13 = arith.constant 1 : i32
    %35 = vector.broadcast %c1_i32_13 : i32 to vector<8x256xi32>
    %36 = arith.cmpi sge, %24, %35 : vector<8x256xi32>
    %37 = arith.andi %34, %36 : vector<8x256xi1>
    %c17_i32 = arith.constant 17 : i32
    %38 = tpu.dynamic_rotate %21 by %c17_i32 dim 1 : vector<8x256xf32>, i32 -> vector<8x256xf32>
    %cst_14 = arith.constant 0.000000e+00 : f32
    %39 = vector.broadcast %cst_14 : f32 to vector<8x256xf32>
    %40 = arith.select %37, %38, %39 : vector<8x256xi1>, vector<8x256xf32>
    %c0_15 = arith.constant 0 : index
    %c0_16 = arith.constant 0 : index
    %c0_17 = arith.constant 0 : index
    %41 = vector.load %arg3[%c0_15, %c0_16, %c0_17] : memref<9x8x8xbf16, #tpu.memory_space<vmem>>, vector<1x8x8xbf16>
    %42 = vector.shape_cast %41 : vector<1x8x8xbf16> to vector<8x8xbf16>
    %43 = arith.truncf %40 : vector<8x256xf32> to vector<8x256xbf16>
    %cst_18 = arith.constant dense<0.000000e+00> : vector<8x256xf32>
    %44 = tpu.matmul %42, %43, %cst_18 {dimension_numbers = #tpu.dot_dimension_numbers<[1], [0], [0], [1], [0, 0, 1, 1], [], []>} : vector<8x8xbf16>, vector<8x256xbf16>, vector<8x256xf32> -> vector<8x256xf32>
    %45 = arith.addf %32, %44 : vector<8x256xf32>
    %c1_i32_19 = arith.constant 1 : i32
    %46 = vector.broadcast %c1_i32_19 : i32 to vector<8x256xi32>
    %47 = arith.cmpi sge, %28, %46 : vector<8x256xi32>
    %c16_i32 = arith.constant 16 : i32
    %48 = tpu.dynamic_rotate %21 by %c16_i32 dim 1 : vector<8x256xf32>, i32 -> vector<8x256xf32>
    %cst_20 = arith.constant 0.000000e+00 : f32
    %49 = vector.broadcast %cst_20 : f32 to vector<8x256xf32>
    %50 = arith.select %47, %48, %49 : vector<8x256xi1>, vector<8x256xf32>
    %c1 = arith.constant 1 : index
    %c0_21 = arith.constant 0 : index
    %c0_22 = arith.constant 0 : index
    %51 = vector.load %arg3[%c1, %c0_21, %c0_22] : memref<9x8x8xbf16, #tpu.memory_space<vmem>>, vector<1x8x8xbf16>
    %52 = vector.shape_cast %51 : vector<1x8x8xbf16> to vector<8x8xbf16>
    %53 = arith.truncf %50 : vector<8x256xf32> to vector<8x256xbf16>
    %cst_23 = arith.constant dense<0.000000e+00> : vector<8x256xf32>
    %54 = tpu.matmul %52, %53, %cst_23 {dimension_numbers = #tpu.dot_dimension_numbers<[1], [0], [0], [1], [0, 0, 1, 1], [], []>} : vector<8x8xbf16>, vector<8x256xbf16>, vector<8x256xf32> -> vector<8x256xf32>
    %55 = arith.addf %45, %54 : vector<8x256xf32>
    %c1_i32_24 = arith.constant 1 : i32
    %56 = vector.broadcast %c1_i32_24 : i32 to vector<8x256xi32>
    %57 = arith.cmpi sge, %28, %56 : vector<8x256xi32>
    %c14_i32 = arith.constant 14 : i32
    %58 = vector.broadcast %c14_i32 : i32 to vector<8x256xi32>
    %59 = arith.cmpi sle, %24, %58 : vector<8x256xi32>
    %60 = arith.andi %57, %59 : vector<8x256xi1>
    %c15_i32_25 = arith.constant 15 : i32
    %61 = tpu.dynamic_rotate %21 by %c15_i32_25 dim 1 : vector<8x256xf32>, i32 -> vector<8x256xf32>
    %cst_26 = arith.constant 0.000000e+00 : f32
    %62 = vector.broadcast %cst_26 : f32 to vector<8x256xf32>
    %63 = arith.select %60, %61, %62 : vector<8x256xi1>, vector<8x256xf32>
    %c2 = arith.constant 2 : index
    %c0_27 = arith.constant 0 : index
    %c0_28 = arith.constant 0 : index
    %64 = vector.load %arg3[%c2, %c0_27, %c0_28] : memref<9x8x8xbf16, #tpu.memory_space<vmem>>, vector<1x8x8xbf16>
    %65 = vector.shape_cast %64 : vector<1x8x8xbf16> to vector<8x8xbf16>
    %66 = arith.truncf %63 : vector<8x256xf32> to vector<8x256xbf16>
    %cst_29 = arith.constant dense<0.000000e+00> : vector<8x256xf32>
    %67 = tpu.matmul %65, %66, %cst_29 {dimension_numbers = #tpu.dot_dimension_numbers<[1], [0], [0], [1], [0, 0, 1, 1], [], []>} : vector<8x8xbf16>, vector<8x256xbf16>, vector<8x256xf32> -> vector<8x256xf32>
    %68 = arith.addf %55, %67 : vector<8x256xf32>
    %c1_i32_30 = arith.constant 1 : i32
    %69 = vector.broadcast %c1_i32_30 : i32 to vector<8x256xi32>
    %70 = arith.cmpi sge, %24, %69 : vector<8x256xi32>
    %c1_i32_31 = arith.constant 1 : i32
    %71 = tpu.dynamic_rotate %21 by %c1_i32_31 dim 1 : vector<8x256xf32>, i32 -> vector<8x256xf32>
    %cst_32 = arith.constant 0.000000e+00 : f32
    %72 = vector.broadcast %cst_32 : f32 to vector<8x256xf32>
    %73 = arith.select %70, %71, %72 : vector<8x256xi1>, vector<8x256xf32>
    %c3 = arith.constant 3 : index
    %c0_33 = arith.constant 0 : index
    %c0_34 = arith.constant 0 : index
    %74 = vector.load %arg3[%c3, %c0_33, %c0_34] : memref<9x8x8xbf16, #tpu.memory_space<vmem>>, vector<1x8x8xbf16>
    %75 = vector.shape_cast %74 : vector<1x8x8xbf16> to vector<8x8xbf16>
    %76 = arith.truncf %73 : vector<8x256xf32> to vector<8x256xbf16>
    %cst_35 = arith.constant dense<0.000000e+00> : vector<8x256xf32>
    %77 = tpu.matmul %75, %76, %cst_35 {dimension_numbers = #tpu.dot_dimension_numbers<[1], [0], [0], [1], [0, 0, 1, 1], [], []>} : vector<8x8xbf16>, vector<8x256xbf16>, vector<8x256xf32> -> vector<8x256xf32>
    %78 = arith.addf %68, %77 : vector<8x256xf32>
    %c14_i32_36 = arith.constant 14 : i32
    %79 = vector.broadcast %c14_i32_36 : i32 to vector<8x256xi32>
    %80 = arith.cmpi sle, %24, %79 : vector<8x256xi32>
    %c255_i32 = arith.constant 255 : i32
    %81 = tpu.dynamic_rotate %21 by %c255_i32 dim 1 : vector<8x256xf32>, i32 -> vector<8x256xf32>
    %cst_37 = arith.constant 0.000000e+00 : f32
    %82 = vector.broadcast %cst_37 : f32 to vector<8x256xf32>
    %83 = arith.select %80, %81, %82 : vector<8x256xi1>, vector<8x256xf32>
    %c5 = arith.constant 5 : index
    %c0_38 = arith.constant 0 : index
    %c0_39 = arith.constant 0 : index
    %84 = vector.load %arg3[%c5, %c0_38, %c0_39] : memref<9x8x8xbf16, #tpu.memory_space<vmem>>, vector<1x8x8xbf16>
    %85 = vector.shape_cast %84 : vector<1x8x8xbf16> to vector<8x8xbf16>
    %86 = arith.truncf %83 : vector<8x256xf32> to vector<8x256xbf16>
    %cst_40 = arith.constant dense<0.000000e+00> : vector<8x256xf32>
    %87 = tpu.matmul %85, %86, %cst_40 {dimension_numbers = #tpu.dot_dimension_numbers<[1], [0], [0], [1], [0, 0, 1, 1], [], []>} : vector<8x8xbf16>, vector<8x256xbf16>, vector<8x256xf32> -> vector<8x256xf32>
    %88 = arith.addf %78, %87 : vector<8x256xf32>
    %c14_i32_41 = arith.constant 14 : i32
    %89 = vector.broadcast %c14_i32_41 : i32 to vector<8x256xi32>
    %90 = arith.cmpi sle, %28, %89 : vector<8x256xi32>
    %c1_i32_42 = arith.constant 1 : i32
    %91 = vector.broadcast %c1_i32_42 : i32 to vector<8x256xi32>
    %92 = arith.cmpi sge, %24, %91 : vector<8x256xi32>
    %93 = arith.andi %90, %92 : vector<8x256xi1>
    %c241_i32 = arith.constant 241 : i32
    %94 = tpu.dynamic_rotate %21 by %c241_i32 dim 1 : vector<8x256xf32>, i32 -> vector<8x256xf32>
    %cst_43 = arith.constant 0.000000e+00 : f32
    %95 = vector.broadcast %cst_43 : f32 to vector<8x256xf32>
    %96 = arith.select %93, %94, %95 : vector<8x256xi1>, vector<8x256xf32>
    %c6 = arith.constant 6 : index
    %c0_44 = arith.constant 0 : index
    %c0_45 = arith.constant 0 : index
    %97 = vector.load %arg3[%c6, %c0_44, %c0_45] : memref<9x8x8xbf16, #tpu.memory_space<vmem>>, vector<1x8x8xbf16>
    %98 = vector.shape_cast %97 : vector<1x8x8xbf16> to vector<8x8xbf16>
    %99 = arith.truncf %96 : vector<8x256xf32> to vector<8x256xbf16>
    %cst_46 = arith.constant dense<0.000000e+00> : vector<8x256xf32>
    %100 = tpu.matmul %98, %99, %cst_46 {dimension_numbers = #tpu.dot_dimension_numbers<[1], [0], [0], [1], [0, 0, 1, 1], [], []>} : vector<8x8xbf16>, vector<8x256xbf16>, vector<8x256xf32> -> vector<8x256xf32>
    %101 = arith.addf %88, %100 : vector<8x256xf32>
    %c14_i32_47 = arith.constant 14 : i32
    %102 = vector.broadcast %c14_i32_47 : i32 to vector<8x256xi32>
    %103 = arith.cmpi sle, %28, %102 : vector<8x256xi32>
    %c240_i32 = arith.constant 240 : i32
    %104 = tpu.dynamic_rotate %21 by %c240_i32 dim 1 : vector<8x256xf32>, i32 -> vector<8x256xf32>
    %cst_48 = arith.constant 0.000000e+00 : f32
    %105 = vector.broadcast %cst_48 : f32 to vector<8x256xf32>
    %106 = arith.select %103, %104, %105 : vector<8x256xi1>, vector<8x256xf32>
    %c7 = arith.constant 7 : index
    %c0_49 = arith.constant 0 : index
    %c0_50 = arith.constant 0 : index
    %107 = vector.load %arg3[%c7, %c0_49, %c0_50] : memref<9x8x8xbf16, #tpu.memory_space<vmem>>, vector<1x8x8xbf16>
    %108 = vector.shape_cast %107 : vector<1x8x8xbf16> to vector<8x8xbf16>
    %109 = arith.truncf %106 : vector<8x256xf32> to vector<8x256xbf16>
    %cst_51 = arith.constant dense<0.000000e+00> : vector<8x256xf32>
    %110 = tpu.matmul %108, %109, %cst_51 {dimension_numbers = #tpu.dot_dimension_numbers<[1], [0], [0], [1], [0, 0, 1, 1], [], []>} : vector<8x8xbf16>, vector<8x256xbf16>, vector<8x256xf32> -> vector<8x256xf32>
    %111 = arith.addf %101, %110 : vector<8x256xf32>
    %c14_i32_52 = arith.constant 14 : i32
    %112 = vector.broadcast %c14_i32_52 : i32 to vector<8x256xi32>
    %113 = arith.cmpi sle, %28, %112 : vector<8x256xi32>
    %c14_i32_53 = arith.constant 14 : i32
    %114 = vector.broadcast %c14_i32_53 : i32 to vector<8x256xi32>
    %115 = arith.cmpi sle, %24, %114 : vector<8x256xi32>
    %116 = arith.andi %113, %115 : vector<8x256xi1>
    %c239_i32 = arith.constant 239 : i32
    %117 = tpu.dynamic_rotate %21 by %c239_i32 dim 1 : vector<8x256xf32>, i32 -> vector<8x256xf32>
    %cst_54 = arith.constant 0.000000e+00 : f32
    %118 = vector.broadcast %cst_54 : f32 to vector<8x256xf32>
    %119 = arith.select %116, %117, %118 : vector<8x256xi1>, vector<8x256xf32>
    %c8 = arith.constant 8 : index
    %c0_55 = arith.constant 0 : index
    %c0_56 = arith.constant 0 : index
    %120 = vector.load %arg3[%c8, %c0_55, %c0_56] : memref<9x8x8xbf16, #tpu.memory_space<vmem>>, vector<1x8x8xbf16>
    %121 = vector.shape_cast %120 : vector<1x8x8xbf16> to vector<8x8xbf16>
    %122 = arith.truncf %119 : vector<8x256xf32> to vector<8x256xbf16>
    %cst_57 = arith.constant dense<0.000000e+00> : vector<8x256xf32>
    %123 = tpu.matmul %121, %122, %cst_57 {dimension_numbers = #tpu.dot_dimension_numbers<[1], [0], [0], [1], [0, 0, 1, 1], [], []>} : vector<8x8xbf16>, vector<8x256xbf16>, vector<8x256xf32> -> vector<8x256xf32>
    %124 = arith.addf %111, %123 : vector<8x256xf32>
    %cst_58 = arith.constant dense<0.000000e+00> : vector<8xf32>
    %125 = vector.multi_reduction <add>, %124, %cst_58 [1] : vector<8x256xf32> to vector<8xf32>
    %126 = vector.shape_cast %125 : vector<8xf32> to vector<8x1xf32>
    %cst_59 = arith.constant 2.560000e+02 : f32
    %127 = vector.broadcast %cst_59 : f32 to vector<8x1xf32>
    %128 = arith.divf %126, %127 : vector<8x1xf32>
    %129 = vector.broadcast %128 : vector<8x1xf32> to vector<8x256xf32>
    %130 = arith.subf %124, %129 : vector<8x256xf32>
    %131 = arith.mulf %130, %130 : vector<8x256xf32>
    %cst_60 = arith.constant dense<0.000000e+00> : vector<8xf32>
    %132 = vector.multi_reduction <add>, %131, %cst_60 [1] : vector<8x256xf32> to vector<8xf32>
    %133 = vector.shape_cast %132 : vector<8xf32> to vector<8x1xf32>
    %cst_61 = arith.constant 2.560000e+02 : f32
    %134 = vector.broadcast %cst_61 : f32 to vector<8x1xf32>
    %135 = arith.divf %133, %134 : vector<8x1xf32>
    %cst_62 = arith.constant 9.99999974E-6 : f32
    %136 = vector.broadcast %cst_62 : f32 to vector<8x1xf32>
    %137 = arith.addf %135, %136 : vector<8x1xf32>
    %138 = math.rsqrt %137 : vector<8x1xf32>
    %139 = vector.broadcast %138 : vector<8x1xf32> to vector<8x256xf32>
    %140 = arith.mulf %130, %139 : vector<8x256xf32>
    %cst_63 = arith.constant 0.000000e+00 : f32
    %141 = vector.broadcast %cst_63 : f32 to vector<8x256xf32>
    %142 = arith.maximumf %140, %141 : vector<8x256xf32>
    %c0_64 = arith.constant 0 : index
    %c0_65 = arith.constant 0 : index
    %143 = vector.load %arg4[%c0_64, %c0_65] : memref<4x8xbf16, #tpu.memory_space<vmem>>, vector<4x8xbf16>
    %144 = arith.truncf %142 : vector<8x256xf32> to vector<8x256xbf16>
    %cst_66 = arith.constant dense<0.000000e+00> : vector<4x256xf32>
    %145 = tpu.matmul %143, %144, %cst_66 {dimension_numbers = #tpu.dot_dimension_numbers<[1], [0], [0], [1], [0, 0, 1, 1], [], []>} : vector<4x8xbf16>, vector<8x256xbf16>, vector<4x256xf32> -> vector<4x256xf32>
    %cst_67 = arith.constant dense<0.000000e+00> : vector<4xf32>
    %146 = vector.multi_reduction <add>, %145, %cst_67 [1] : vector<4x256xf32> to vector<4xf32>
    %147 = vector.shape_cast %146 : vector<4xf32> to vector<4x1xf32>
    %cst_68 = arith.constant 2.560000e+02 : f32
    %148 = vector.broadcast %cst_68 : f32 to vector<4x1xf32>
    %149 = arith.divf %147, %148 : vector<4x1xf32>
    %150 = vector.broadcast %149 : vector<4x1xf32> to vector<4x256xf32>
    %151 = arith.subf %145, %150 : vector<4x256xf32>
    %152 = arith.mulf %151, %151 : vector<4x256xf32>
    %cst_69 = arith.constant dense<0.000000e+00> : vector<4xf32>
    %153 = vector.multi_reduction <add>, %152, %cst_69 [1] : vector<4x256xf32> to vector<4xf32>
    %154 = vector.shape_cast %153 : vector<4xf32> to vector<4x1xf32>
    %cst_70 = arith.constant 2.560000e+02 : f32
    %155 = vector.broadcast %cst_70 : f32 to vector<4x1xf32>
    %156 = arith.divf %154, %155 : vector<4x1xf32>
    %cst_71 = arith.constant 9.99999974E-6 : f32
    %157 = vector.broadcast %cst_71 : f32 to vector<4x1xf32>
    %158 = arith.addf %156, %157 : vector<4x1xf32>
    %159 = math.rsqrt %158 : vector<4x1xf32>
    %160 = vector.broadcast %159 : vector<4x1xf32> to vector<4x256xf32>
    %161 = arith.mulf %151, %160 : vector<4x256xf32>
    %162 = arith.addf %161, %0 : vector<4x256xf32>
    %cst_72 = arith.constant 0.000000e+00 : f32
    %163 = vector.broadcast %cst_72 : f32 to vector<4x256xf32>
    %164 = arith.maximumf %162, %163 : vector<4x256xf32>
    %c0_73 = arith.constant 0 : index
    %c0_74 = arith.constant 0 : index
    %165 = vector.load %arg5[%c0_73, %c0_74] : memref<4x256xf32, #tpu.memory_space<vmem>>, vector<4x256xf32>
    tpu.vector_store %arg5[%c0_73, %c0_74], %164 {strides = array<i32>} : memref<4x256xf32, #tpu.memory_space<vmem>>, vector<4x256xf32>,
    return
  }
  func.func @transform_0(%arg0: i32) -> (i32, i32) {
    %c0_i32 = arith.constant 0 : i32
    %c0_i32_0 = arith.constant 0 : i32
    return %c0_i32, %arg0 : i32, i32
  }
  func.func @transform_1(%arg0: i32) -> (i32, i32) {
    %c0_i32 = arith.constant 0 : i32
    %c0_i32_0 = arith.constant 0 : i32
    %c0_i32_1 = arith.constant 0 : i32
    return %c0_i32, %c0_i32_0 : i32, i32
  }
  func.func @transform_2(%arg0: i32) -> (i32, i32, i32) {
    %c0_i32 = arith.constant 0 : i32
    %c0_i32_0 = arith.constant 0 : i32
    %c0_i32_1 = arith.constant 0 : i32
    %c0_i32_2 = arith.constant 0 : i32
    return %c0_i32, %c0_i32_0, %c0_i32_1 : i32, i32, i32
  }
  func.func @transform_3(%arg0: i32) -> (i32, i32) {
    %c0_i32 = arith.constant 0 : i32
    %c0_i32_0 = arith.constant 0 : i32
    %c0_i32_1 = arith.constant 0 : i32
    return %c0_i32, %c0_i32_0 : i32, i32
  }
  func.func @transform_4(%arg0: i32) -> (i32, i32) {
    %c0_i32 = arith.constant 0 : i32
    %c0_i32_0 = arith.constant 0 : i32
    return %c0_i32, %arg0 : i32, i32
  }
}

</mosaic_0001>

<llo_original>
// kernel: tpu_custom_call.1
$region0: #{tpu_custom_call.1}
  #allocation0 [shape = 'u32[]', space=smem, size = 0x4, offset = 0x4, fixed_abs, tag = 'smem constant byte address 0x4 - core index']
  #allocation1 [shape = 'u32[144,128]{1,0:T(1,128)}', space=vmem, size = 0x12000, scoped, tag = 'internal scratch']
  %s0 = inlined_call_operand.vmem [shape: f32[4,1024], index: 0, kind: input, shape index: {}]
  %s1 = inlined_call_operand.vmem [shape: bf16[8,4], index: 1, kind: input, shape index: {}]
  %s2 = inlined_call_operand.vmem [shape: bf16[9,8,8], index: 2, kind: input, shape index: {}]
  %s3 = inlined_call_operand.vmem [shape: bf16[4,8], index: 3, kind: input, shape index: {}]
  %s4 = inlined_call_operand.hbm [shape: f32[4,1024], index: 4, kind: output, shape index: {}]
  %s5 = sld [smem:[#allocation0]]
  $region49: #{tpu_custom_call.1} parent=0
    _
  %s7 = ssub.s32 1, %s5
  %s8 = scalar_select 0, %s7, %s5
  $region1: #{tpu_custom_call.1} parent=0
    #allocation2 [shape = 'u8[8192]{0}', space=vmem, size = 0x2000, scoped, tag = 'output window, operand 0']
    #allocation3 [shape = 's32[2]{0}', space=sflag, size = 0x8, scoped, tag = 'scoped memory for tpu_custom_call.1']
    %9 = vsyncpa [#allocation3], 0
    %s10 = scalar_lea.sflag [#allocation3], 1
    %11 = vsyncpa %s10, 0
    loop: start=0, step=1, limit=6
    $region2: #{tpu_custom_call.1} parent=1 // loop_pre_header
      _
    $region3: #{tpu_custom_call.1} parent=1 // loop_header
      %s13 = sphi 0, %s17
      %p14 = scmp.ge.s32.totalorder %s13, 6
      %s23 = sphi 0, %s25
      %s26 = sphi 0, %s23
      %s27 = sphi 0, %s26
      %s43 = sphi 0, %s27
      %s47 = sphi 0, %s47
      %s49 = sphi 0, %s47
      %s50 = sphi 0, %s49
      %s64 = sphi 0, %s50
      %s68 = sphi 0, %s68
      %s70 = sphi 0, %s68
      %s71 = sphi 0, %s70
      %s85 = sphi 0, %s71
      %s89 = sphi 0, %s89
      %s91 = sphi 0, %s89
      %s92 = sphi 0, %s91
      %s106 = sphi 0, %s92
      %s112 = sphi 0, %s114
      %s115 = sphi 0, %s112
      %s116 = sphi 0, %s115
      %s132 = sphi 0, %s116
    $region4: #{tpu_custom_call.1} parent=1 // loop_header_branch
      %16 = sbr.rel (%p14) target = $region8
    $region5: #{tpu_custom_call.1} parent=1 // loop_body
      %s18 = ssub.s32 %s13, 1
      %s19 = ssub.s32 %s13, 2
      %s20 = sadd.s32 %s13, 1
      %s21 = ssub.s32 %s13, %s20
      %p22 = scmp.eq.s32.totalorder %s21, 0
      %s24 = sadd.s32 %s23, 1
      %s25 = scalar_select %p22, %s23, %s24
      %p28 = pneg %p22
      %p29 = scmp.eq.s32.totalorder %s13, 3
      %p30 = por %p28, %p29
      %p31 = scmp.ne.s32.totalorder %s23, %s26
      %p32 = scmp.eq.s32.totalorder %s13, 0
      %p33 = por %p31, %p32
      %p34 = scmp.ne.s32.totalorder %s23, %s26
      %p35 = scmp.eq.s32.totalorder %s18, 3
      %p36 = por %p34, %p35
      %p37 = scmp.ne.s32.totalorder %s26, %s27
      %p38 = scmp.eq.s32.totalorder %s18, 0
      %p39 = por %p37, %p38
      %p40 = scmp.ne.s32.totalorder %s26, %s27
      %p41 = scmp.eq.s32.totalorder %s19, 3
      %p42 = por %p40, %p41
      %p44 = scmp.ne.s32.totalorder %s27, %s43
      %p45 = scmp.eq.s32.totalorder %s19, 0
      %p46 = por %p44, %p45
      %s48 = sadd.s32 %s47, 1
      %p51 = scmp.eq.s32.totalorder %s13, 3
      %p52 = scmp.ne.s32.totalorder %s47, %s49
      %p53 = scmp.eq.s32.totalorder %s13, 0
      %p54 = por %p52, %p53
      %p55 = scmp.ne.s32.totalorder %s47, %s49
      %p56 = scmp.eq.s32.totalorder %s18, 3
      %p57 = por %p55, %p56
      %p58 = scmp.ne.s32.totalorder %s49, %s50
      %p59 = scmp.eq.s32.totalorder %s18, 0
      %p60 = por %p58, %p59
      %p61 = scmp.ne.s32.totalorder %s49, %s50
      %p62 = scmp.eq.s32.totalorder %s19, 3
      %p63 = por %p61, %p62
      %p65 = scmp.ne.s32.totalorder %s50, %s64
      %p66 = scmp.eq.s32.totalorder %s19, 0
      %p67 = por %p65, %p66
      %s69 = sadd.s32 %s68, 1
      %p72 = scmp.eq.s32.totalorder %s13, 3
      %p73 = scmp.ne.s32.totalorder %s68, %s70
      %p74 = scmp.eq.s32.totalorder %s13, 0
      %p75 = por %p73, %p74
      %p76 = scmp.ne.s32.totalorder %s68, %s70
      %p77 = scmp.eq.s32.totalorder %s18, 3
      %p78 = por %p76, %p77
      %p79 = scmp.ne.s32.totalorder %s70, %s71
      %p80 = scmp.eq.s32.totalorder %s18, 0
      %p81 = por %p79, %p80
      %p82 = scmp.ne.s32.totalorder %s70, %s71
      %p83 = scmp.eq.s32.totalorder %s19, 3
      %p84 = por %p82, %p83
      %p86 = scmp.ne.s32.totalorder %s71, %s85
      %p87 = scmp.eq.s32.totalorder %s19, 0
      %p88 = por %p86, %p87
      %s90 = sadd.s32 %s89, 1
      %p93 = scmp.eq.s32.totalorder %s13, 3
      %p94 = scmp.ne.s32.totalorder %s89, %s91
      %p95 = scmp.eq.s32.totalorder %s13, 0
      %p96 = por %p94, %p95
      %p97 = scmp.ne.s32.totalorder %s89, %s91
      %p98 = scmp.eq.s32.totalorder %s18, 3
      %p99 = por %p97, %p98
      %p100 = scmp.ne.s32.totalorder %s91, %s92
      %p101 = scmp.eq.s32.totalorder %s18, 0
      %p102 = por %p100, %p101
      %p103 = scmp.ne.s32.totalorder %s91, %s92
      %p104 = scmp.eq.s32.totalorder %s19, 3
      %p105 = por %p103, %p104
      %p107 = scmp.ne.s32.totalorder %s92, %s106
      %p108 = scmp.eq.s32.totalorder %s19, 0
      %p109 = por %p107, %p108
      %s110 = ssub.s32 %s13, %s20
      %p111 = scmp.eq.s32.totalorder %s110, 0
      %s113 = sadd.s32 %s112, 1
      %s114 = scalar_select %p111, %s112, %s113
      %p117 = pneg %p111
      %p118 = scmp.eq.s32.totalorder %s13, 3
      %p119 = por %p117, %p118
      %p120 = scmp.ne.s32.totalorder %s112, %s115
      %p121 = scmp.eq.s32.totalorder %s13, 0
      %p122 = por %p120, %p121
      %p123 = scmp.ne.s32.totalorder %s112, %s115
      %p124 = scmp.eq.s32.totalorder %s18, 3
      %p125 = por %p123, %p124
      %p126 = scmp.ne.s32.totalorder %s115, %s116
      %p127 = scmp.eq.s32.totalorder %s18, 0
      %p128 = por %p126, %p127
      %p129 = scmp.ne.s32.totalorder %s115, %s116
      %p130 = scmp.eq.s32.totalorder %s19, 3
      %p131 = por %p129, %p130
      %p133 = scmp.ne.s32.totalorder %s116, %s132
      %p134 = scmp.eq.s32.totalorder %s19, 0
      %p135 = por %p133, %p134
      %p136 = scmp.le.s32.totalorder 1, %s13
      %p137 = scmp.lt.s32.totalorder %s13, 5
      %p138 = pnand %p136, %p137
      %p139 = pneg %p138
      // Predicated region
      $region9: #{tpu_custom_call.1} parent=5 // pred_check
        _
      $region10: #{tpu_custom_call.1} parent=5 // pred_check_branch
        %141 = sbr.rel (%p138) target = $region12
      $region11: #{tpu_custom_call.1} parent=5 // pred_region
        %s142 = ssub.s32 %s13, 1
        // Predicated region
        $region13: #{tpu_custom_call.1} parent=11 // pred_check
          %p143 = pneg %p60
        $region14: #{tpu_custom_call.1} parent=11 // pred_check_branch
          %145 = sbr.rel (%p143) target = $region16
        $region15: #{tpu_custom_call.1} parent=11 // pred_region
          _
        $region16: #{tpu_custom_call.1} parent=11 // pred_fallthru
          _
        // Predicated region
        $region17: #{tpu_custom_call.1} parent=11 // pred_check
          %p146 = pneg %p81
        $region18: #{tpu_custom_call.1} parent=11 // pred_check_branch
          %148 = sbr.rel (%p146) target = $region20
        $region19: #{tpu_custom_call.1} parent=11 // pred_region
          _
        $region20: #{tpu_custom_call.1} parent=11 // pred_fallthru
          _
        // Predicated region
        $region21: #{tpu_custom_call.1} parent=11 // pred_check
          %p149 = pneg %p102
        $region22: #{tpu_custom_call.1} parent=11 // pred_check_branch
          %151 = sbr.rel (%p149) target = $region24
        $region23: #{tpu_custom_call.1} parent=11 // pred_region
          _
        $region24: #{tpu_custom_call.1} parent=11 // pred_fallthru
          _
      $region12: #{tpu_custom_call.1} parent=5 // pred_fallthru
        _
      %p152 = scmp.lt.s32.totalorder %s13, 4
      // Predicated region
      $region25: #{tpu_custom_call.1} parent=5 // pred_check
        %p153 = pneg %p152
      $region26: #{tpu_custom_call.1} parent=5 // pred_check_branch
        %155 = sbr.rel (%p153) target = $region28
      $region27: #{tpu_custom_call.1} parent=5 // pred_region
        // Predicated region
        $region29: #{tpu_custom_call.1} parent=27 // pred_check
          %p156 = pneg %p33
        $region30: #{tpu_custom_call.1} parent=27 // pred_check_branch
          %158 = sbr.rel (%p156) target = $region32
        $region31: #{tpu_custom_call.1} parent=27 // pred_region
          %s159 = smul.u32 2, %s13
          %p160 = scmp.lt.s32.totalorder %s159, 7
          %s161 = scalar_select %p160, %s159, 7
          %s162 = smul.addr %s161, 4
          %s163 = scalar_lea.vmem %s0, %s162
          %s164 = smul.u32 2, %s13
        $region32: #{tpu_custom_call.1} parent=27 // pred_fallthru
          _
      $region28: #{tpu_custom_call.1} parent=5 // pred_fallthru
        _
      %p165 = scmp.le.s32.totalorder 1, %s13
      %p166 = scmp.lt.s32.totalorder %s13, 5
      %p167 = pnand %p165, %p166
      %p168 = pneg %p167
      // Predicated region
      $region33: #{tpu_custom_call.1} parent=5 // pred_check
        _
      $region34: #{tpu_custom_call.1} parent=5 // pred_check_branch
        %170 = sbr.rel (%p167) target = $region36
      $region35: #{tpu_custom_call.1} parent=5 // pred_region
        %s171 = ssub.s32 %s13, 1
        %s172 = smul.u32 2, %s18
        %p173 = scmp.lt.s32.totalorder %s172, 7
        %s174 = scalar_select %p173, %s172, 7
        %s175 = smul.addr %s174, 4
        %s176 = scalar_lea.vmem %s0, %s175
        %p177 = pneg %p39
        %p178 = pneg %p36
        %p179 = pneg %p60
        %p180 = pneg %p57
        %p181 = pneg %p81
        %p182 = pneg %p78
        %p183 = pneg %p102
        %p184 = pneg %p99
        %p185 = pneg %p128
        %p186 = pneg %p125
        %s187 = sand.u32 %s115, 1
        %s188 = scalar_lea.sflag [#allocation3], %s187
        %s189 = sand.u32 %s115, 1
        %s190 = smul.addr %s189, 8
        %s191 = scalar_lea.vmem [#allocation2], %s190
        %s192 = smul.u32 2, %s18
        %p193 = scmp.lt.s32.totalorder %s192, 7
        %s194 = scalar_select %p193, %s192, 7
        %s195 = smul.addr %s194, 4
        %s196 = scalar_lea.vmem %s0, %s195
        %s197 = smul.u32 2, %s18
        %s198 = smul.u32 2, %s18
        %v200 = vld [vmem:[%s196] sm:$0xff]
        %v201 = vld [vmem:[%s1] sm:$0xf]
        %v203 = vcombine.high %v200, %v200
        %v205 = vpack.c.bf16 %v200, %v200
        %v206 = vpack.c.bf16 %v203, %v203
        %vm207 = vcmask 31744
        %v209 = vsel %vm207, %v201, 0
        %vm211 = vcmask 1041408
        %v213 = vsel %vm211, %v205, 0
        %v216 = vsel %vm211, %v206, 0
        %218 = vmatprep.subr.bf16.mxu0 %v216
        %219 = vmatpush1.bf16.msra.mxu0 %v213
        %220 = vmatprep.subr.bf16.mxu0 0
        %221 = vmatpush1.bf16.msra.mxu0 0
        %222 = vmatprep.subr.bf16.mxu0 0
        %223 = vmatpush1.bf16.msra.mxu0 0
        %224 = vmatprep.subr.bf16.mxu0 0
        %225 = vmatpush1.bf16.msra.mxu0 0
        %226 = vmatprep.subr.bf16.mxu0 0
        %227 = vmatpush1.bf16.msra.mxu0 0
        %228 = vmatprep.subr.bf16.mxu0 0
        %229 = vmatpush1.bf16.msra.mxu0 0
        %230 = vmatprep.subr.bf16.mxu0 0
        %231 = vmatpush1.bf16.msra.mxu0 0
        %232 = vmatprep.subr.bf16.mxu0 0
        %233 = vmatpush1.bf16.msra.mxu0 0
        %234 = vmatprep.subr.bf16.mxu0 0
        %235 = vmatpush1.bf16.msra.mxu0 0
        %236 = vmatprep.subr.bf16.mxu0 0
        %237 = vmatpush1.bf16.msra.mxu0 0
        %238 = vmatprep.subr.bf16.mxu0 0
        %239 = vmatpush1.bf16.msra.mxu0 0
        %240 = vmatprep.subr.bf16.mxu0 0
        %241 = vmatpush1.bf16.msra.mxu0 0
        %242 = vmatprep.subr.bf16.mxu0 0
        %243 = vmatpush1.bf16.msra.mxu0 0
        %244 = vmatprep.subr.bf16.mxu0 0
        %245 = vmatpush1.bf16.msra.mxu0 0
        %246 = vmatprep.subr.bf16.mxu0 0
        %247 = vmatpush1.bf16.msra.mxu0 0
        %248 = vmatprep.subr.bf16.mxu0 0
        %249 = vmatpush1.bf16.msra.mxu0 0
        %250 = vmatprep.mubr.bf16.mxu0 0
        %251 = vmatmul.mubr.bf16.gmra.mrb[0].mxu0 %v209
        %v252 = vpop.f32.mrb[0].mxu0
        %v253 = vadd.f32 0.0, %v252
        %v254 = vpop.f32.mrb[0].mxu0
        %v255 = vadd.f32 0.0, %v254
        %v256 = vpop.f32.mrb[0].mxu0
        %v257 = vpop.f32.mrb[0].mxu0
        %258 = vdwg.mxu0
        %v259 = vadd.f32 %v253, %v255
        %260 = vadd.xlane.f32.xlu0 %v259
        %v261 = vpop.xlane.xlu0 %260
        %v262 = vrcp.pop 256.0
        %v263 = vmul.f32 %v261, %v262
        %v264 = vsub.f32 %v253, %v263
        %v265 = vsub.f32 %v255, %v263
        %v266 = vmul.f32 %v264, %v264
        %v267 = vmul.f32 %v265, %v265
        %v268 = vadd.f32 %v266, %v267
        %269 = vadd.xlane.f32.xlu0 %v268
        %v270 = vpop.xlane.xlu0 %269
        %v271 = vmul.f32 %v270, %v262
        %v272 = vadd.f32 %v271, 1e-05
        %v273 = vrsqrt.pop %v272
        %v274 = vmul.f32 %v264, %v273
        %v275 = vmul.f32 %v265, %v273
        %v276 = vmax.f32 %v274, 0.0
        %v277 = vmax.f32 %v275, 0.0
        %v278 = vlaneseq
        %v279 = vand.u32 %v278, 127
        %v280 = vadd.s32 %v279, 128
        %v281 = vand.u32 %v279, 15
        %v282 = vand.u32 %v280, 15
        %v283 = vshra.s32 %v279, 4
        %v284 = vshra.s32 %v280, 4
        %v285 = vand.u32 %v283, 15
        %v286 = vand.u32 %v284, 15
        %v287 = vpack.c.bf16 %v276, %v276
        %v288 = vpack.c.bf16 %v277, %v277
        %s289 = scalar_lea.vmem %s2, 16
        %v290 = vld [vmem:[%s289] sm:$0xf]
        %vm291 = vcmp.ge.s32.totalorder %v285, 1
        %vm292 = vcmp.ge.s32.totalorder %v286, 1
        %vm293 = vcmp.ge.s32.totalorder %v281, 1
        %vm294 = vcmp.ge.s32.totalorder %v282, 1
        %vm295 = vmand %vm291, %vm293
        %vm296 = vmand %vm292, %vm294
        %297 = vrot.lane.b32.xlu0 %v276, 17
        %v298 = vpop.permute.xlu0 %297
        %299 = vrot.lane.b32.xlu0 %v277, 17
        %v300 = vpop.permute.xlu0 %299
        %vm301 = vcmp.lt.s32.totalorder %v279, 17
        %v302 = vsel %vm301, %v298, %v300
        %v303 = vsel %vm301, %v300, %v298
        %v304 = vsel %vm295, %v303, 0.0
        %v305 = vsel %vm296, %v302, 0.0
        %v306 = vld [vmem:[%s2] sm:$0xf]
        %v307 = vpack.c.bf16 %v304, %v304
        %v308 = vpack.c.bf16 %v305, %v305
        %vm309 = vcmask 64512
        %v311 = vsel %vm309, %v306, 0
        %vm313 = vcmask 1043456
        %v315 = vsel %vm313, %v307, 0
        %v318 = vsel %vm313, %v308, 0
        %320 = vmatprep.subr.bf16.mxu0 %v318
        %321 = vmatpush1.bf16.msra.mxu0 %v315
        %322 = vmatprep.subr.bf16.mxu0 0
        %323 = vmatpush1.bf16.msra.mxu0 0
        %324 = vmatprep.subr.bf16.mxu0 0
        %325 = vmatpush1.bf16.msra.mxu0 0
        %326 = vmatprep.subr.bf16.mxu0 0
        %327 = vmatpush1.bf16.msra.mxu0 0
        %328 = vmatprep.subr.bf16.mxu0 0
        %329 = vmatpush1.bf16.msra.mxu0 0
        %330 = vmatprep.subr.bf16.mxu0 0
        %331 = vmatpush1.bf16.msra.mxu0 0
        %332 = vmatprep.subr.bf16.mxu0 0
        %333 = vmatpush1.bf16.msra.mxu0 0
        %334 = vmatprep.subr.bf16.mxu0 0
        %335 = vmatpush1.bf16.msra.mxu0 0
        %336 = vmatprep.subr.bf16.mxu0 0
        %337 = vmatpush1.bf16.msra.mxu0 0
        %338 = vmatprep.subr.bf16.mxu0 0
        %339 = vmatpush1.bf16.msra.mxu0 0
        %340 = vmatprep.subr.bf16.mxu0 0
        %341 = vmatpush1.bf16.msra.mxu0 0
        %342 = vmatprep.subr.bf16.mxu0 0
        %343 = vmatpush1.bf16.msra.mxu0 0
        %344 = vmatprep.subr.bf16.mxu0 0
        %345 = vmatpush1.bf16.msra.mxu0 0
        %346 = vmatprep.subr.bf16.mxu0 0
        %347 = vmatpush1.bf16.msra.mxu0 0
        %348 = vmatprep.subr.bf16.mxu0 0
        %349 = vmatpush1.bf16.msra.mxu0 0
        %350 = vmatprep.subr.bf16.mxu0 0
        %351 = vmatpush1.bf16.msra.mxu0 0
        %352 = vmatprep.mubr.bf16.mxu0 0
        %353 = vmatmul.mubr.bf16.gmra.mrb[0].mxu0 %v311
        %v354 = vpop.f32.mrb[0].mxu0
        %v355 = vadd.f32 0.0, %v354
        %v356 = vpop.f32.mrb[0].mxu0
        %v357 = vadd.f32 0.0, %v356
        %v358 = vpop.f32.mrb[0].mxu0
        %v359 = vpop.f32.mrb[0].mxu0
        %360 = vdwg.mxu0
        %v362 = vsel %vm309, %v290, 0
        %v365 = vsel %vm313, %v287, 0
        %v368 = vsel %vm313, %v288, 0
        %370 = vmatprep.subr.bf16.mxu0 %v368
        %371 = vmatpush1.bf16.msra.mxu0 %v365
        %372 = vmatprep.subr.bf16.mxu0 0
        %373 = vmatpush1.bf16.msra.mxu0 0
        %374 = vmatprep.subr.bf16.mxu0 0
        %375 = vmatpush1.bf16.msra.mxu0 0
        %376 = vmatprep.subr.bf16.mxu0 0
        %377 = vmatpush1.bf16.msra.mxu0 0
        %378 = vmatprep.subr.bf16.mxu0 0
        %379 = vmatpush1.bf16.msra.mxu0 0
        %380 = vmatprep.subr.bf16.mxu0 0
        %381 = vmatpush1.bf16.msra.mxu0 0
        %382 = vmatprep.subr.bf16.mxu0 0
        %383 = vmatpush1.bf16.msra.mxu0 0
        %384 = vmatprep.subr.bf16.mxu0 0
        %385 = vmatpush1.bf16.msra.mxu0 0
        %386 = vmatprep.subr.bf16.mxu0 0
        %387 = vmatpush1.bf16.msra.mxu0 0
        %388 = vmatprep.subr.bf16.mxu0 0
        %389 = vmatpush1.bf16.msra.mxu0 0
        %390 = vmatprep.subr.bf16.mxu0 0
        %391 = vmatpush1.bf16.msra.mxu0 0
        %392 = vmatprep.subr.bf16.mxu0 0
        %393 = vmatpush1.bf16.msra.mxu0 0
        %394 = vmatprep.subr.bf16.mxu0 0
        %395 = vmatpush1.bf16.msra.mxu0 0
        %396 = vmatprep.subr.bf16.mxu0 0
        %397 = vmatpush1.bf16.msra.mxu0 0
        %398 = vmatprep.subr.bf16.mxu0 0
        %399 = vmatpush1.bf16.msra.mxu0 0
        %400 = vmatprep.subr.bf16.mxu0 0
        %401 = vmatpush1.bf16.msra.mxu0 0
        %402 = vmatprep.mubr.bf16.mxu0 0
        %403 = vmatmul.mubr.bf16.gmra.mrb[0].mxu0 %v362
        %v404 = vpop.f32.mrb[0].mxu0
        %v405 = vadd.f32 %v355, %v404
        %v406 = vpop.f32.mrb[0].mxu0
        %v407 = vadd.f32 %v357, %v406
        %v408 = vpop.f32.mrb[0].mxu0
        %v409 = vpop.f32.mrb[0].mxu0
        %410 = vdwg.mxu0
        %411 = vrot.lane.b32.xlu0 %v276, 16
        %v412 = vpop.permute.xlu0 %411
        %413 = vrot.lane.b32.xlu0 %v277, 16
        %v414 = vpop.permute.xlu0 %413
        %vm415 = vcmp.lt.s32.totalorder %v279, 16
        %v416 = vsel %vm415, %v412, %v414
        %v417 = vsel %vm415, %v414, %v412
        %v418 = vsel %vm291, %v417, 0.0
        %v419 = vsel %vm292, %v416, 0.0
        %s420 = scalar_lea.vmem %s2, 4
        %v421 = vld [vmem:[%s420] sm:$0xf]
        %v422 = vpack.c.bf16 %v418, %v418
        %v423 = vpack.c.bf16 %v419, %v419
        %v425 = vsel %vm309, %v421, 0
        %v428 = vsel %vm313, %v422, 0
        %v431 = vsel %vm313, %v423, 0
        %433 = vmatprep.subr.bf16.mxu0 %v431
        %434 = vmatpush1.bf16.msra.mxu0 %v428
        %435 = vmatprep.subr.bf16.mxu0 0
        %436 = vmatpush1.bf16.msra.mxu0 0
        %437 = vmatprep.subr.bf16.mxu0 0
        %438 = vmatpush1.bf16.msra.mxu0 0
        %439 = vmatprep.subr.bf16.mxu0 0
        %440 = vmatpush1.bf16.msra.mxu0 0
        %441 = vmatprep.subr.bf16.mxu0 0
        %442 = vmatpush1.bf16.msra.mxu0 0
        %443 = vmatprep.subr.bf16.mxu0 0
        %444 = vmatpush1.bf16.msra.mxu0 0
        %445 = vmatprep.subr.bf16.mxu0 0
        %446 = vmatpush1.bf16.msra.mxu0 0
        %447 = vmatprep.subr.bf16.mxu0 0
        %448 = vmatpush1.bf16.msra.mxu0 0
        %449 = vmatprep.subr.bf16.mxu0 0
        %450 = vmatpush1.bf16.msra.mxu0 0
        %451 = vmatprep.subr.bf16.mxu0 0
        %452 = vmatpush1.bf16.msra.mxu0 0
        %453 = vmatprep.subr.bf16.mxu0 0
        %454 = vmatpush1.bf16.msra.mxu0 0
        %455 = vmatprep.subr.bf16.mxu0 0
        %456 = vmatpush1.bf16.msra.mxu0 0
        %457 = vmatprep.subr.bf16.mxu0 0
        %458 = vmatpush1.bf16.msra.mxu0 0
        %459 = vmatprep.subr.bf16.mxu0 0
        %460 = vmatpush1.bf16.msra.mxu0 0
        %461 = vmatprep.subr.bf16.mxu0 0
        %462 = vmatpush1.bf16.msra.mxu0 0
        %463 = vmatprep.subr.bf16.mxu0 0
        %464 = vmatpush1.bf16.msra.mxu0 0
        %465 = vmatprep.mubr.bf16.mxu0 0
        %466 = vmatmul.mubr.bf16.gmra.mrb[0].mxu0 %v425
        %v467 = vpop.f32.mrb[0].mxu0
        %v468 = vadd.f32 0.0, %v467
        %v469 = vpop.f32.mrb[0].mxu0
        %v470 = vadd.f32 0.0, %v469
        %v471 = vpop.f32.mrb[0].mxu0
        %v472 = vpop.f32.mrb[0].mxu0
        %473 = vdwg.mxu0
        %v474 = vadd.f32 %v405, %v468
        %v475 = vadd.f32 %v407, %v470
        %vm476 = vcmp.le.s32.totalorder %v281, 14
        %vm477 = vcmp.le.s32.totalorder %v282, 14
        %vm478 = vmand %vm291, %vm476
        %vm479 = vmand %vm292, %vm477
        %480 = vrot.lane.b32.xlu0 %v276, 15
        %v481 = vpop.permute.xlu0 %480
        %482 = vrot.lane.b32.xlu0 %v277, 15
        %v483 = vpop.permute.xlu0 %482
        %vm484 = vcmp.lt.s32.totalorder %v279, 15
        %v485 = vsel %vm484, %v481, %v483
        %v486 = vsel %vm484, %v483, %v481
        %v487 = vsel %vm478, %v486, 0.0
        %v488 = vsel %vm479, %v485, 0.0
        %s489 = scalar_lea.vmem %s2, 8
        %v490 = vld [vmem:[%s489] sm:$0xf]
        %v491 = vpack.c.bf16 %v487, %v487
        %v492 = vpack.c.bf16 %v488, %v488
        %v494 = vsel %vm309, %v490, 0
        %v497 = vsel %vm313, %v491, 0
        %v500 = vsel %vm313, %v492, 0
        %502 = vmatprep.subr.bf16.mxu0 %v500
        %503 = vmatpush1.bf16.msra.mxu0 %v497
        %504 = vmatprep.subr.bf16.mxu0 0
        %505 = vmatpush1.bf16.msra.mxu0 0
        %506 = vmatprep.subr.bf16.mxu0 0
        %507 = vmatpush1.bf16.msra.mxu0 0
        %508 = vmatprep.subr.bf16.mxu0 0
        %509 = vmatpush1.bf16.msra.mxu0 0
        %510 = vmatprep.subr.bf16.mxu0 0
        %511 = vmatpush1.bf16.msra.mxu0 0
        %512 = vmatprep.subr.bf16.mxu0 0
        %513 = vmatpush1.bf16.msra.mxu0 0
        %514 = vmatprep.subr.bf16.mxu0 0
        %515 = vmatpush1.bf16.msra.mxu0 0
        %516 = vmatprep.subr.bf16.mxu0 0
        %517 = vmatpush1.bf16.msra.mxu0 0
        %518 = vmatprep.subr.bf16.mxu0 0
        %519 = vmatpush1.bf16.msra.mxu0 0
        %520 = vmatprep.subr.bf16.mxu0 0
        %521 = vmatpush1.bf16.msra.mxu0 0
        %522 = vmatprep.subr.bf16.mxu0 0
        %523 = vmatpush1.bf16.msra.mxu0 0
        %524 = vmatprep.subr.bf16.mxu0 0
        %525 = vmatpush1.bf16.msra.mxu0 0
        %526 = vmatprep.subr.bf16.mxu0 0
        %527 = vmatpush1.bf16.msra.mxu0 0
        %528 = vmatprep.subr.bf16.mxu0 0
        %529 = vmatpush1.bf16.msra.mxu0 0
        %530 = vmatprep.subr.bf16.mxu0 0
        %531 = vmatpush1.bf16.msra.mxu0 0
        %532 = vmatprep.subr.bf16.mxu0 0
        %533 = vmatpush1.bf16.msra.mxu0 0
        %534 = vmatprep.mubr.bf16.mxu0 0
        %535 = vmatmul.mubr.bf16.gmra.mrb[0].mxu0 %v494
        %v536 = vpop.f32.mrb[0].mxu0
        %v537 = vadd.f32 0.0, %v536
        %v538 = vpop.f32.mrb[0].mxu0
        %v539 = vadd.f32 0.0, %v538
        %v540 = vpop.f32.mrb[0].mxu0
        %v541 = vpop.f32.mrb[0].mxu0
        %542 = vdwg.mxu0
        %v543 = vadd.f32 %v474, %v537
        %v544 = vadd.f32 %v475, %v539
        %545 = vrot.lane.b32.xlu0 %v276, 1
        %v546 = vpop.permute.xlu0 %545
        %547 = vrot.lane.b32.xlu0 %v277, 1
        %v548 = vpop.permute.xlu0 %547
        %vm549 = vcmp.lt.s32.totalorder %v279, 1
        %v550 = vsel %vm549, %v546, %v548
        %v551 = vsel %vm549, %v548, %v546
        %v552 = vsel %vm293, %v551, 0.0
        %v553 = vsel %vm294, %v550, 0.0
        %s554 = scalar_lea.vmem %s2, 12
        %v555 = vld [vmem:[%s554] sm:$0xf]
        %v556 = vpack.c.bf16 %v552, %v552
        %v557 = vpack.c.bf16 %v553, %v553
        %v559 = vsel %vm309, %v555, 0
        %v562 = vsel %vm313, %v556, 0
        %v565 = vsel %vm313, %v557, 0
        %567 = vmatprep.subr.bf16.mxu0 %v565
        %568 = vmatpush1.bf16.msra.mxu0 %v562
        %569 = vmatprep.subr.bf16.mxu0 0
        %570 = vmatpush1.bf16.msra.mxu0 0
        %571 = vmatprep.subr.bf16.mxu0 0
        %572 = vmatpush1.bf16.msra.mxu0 0
        %573 = vmatprep.subr.bf16.mxu0 0
        %574 = vmatpush1.bf16.msra.mxu0 0
        %575 = vmatprep.subr.bf16.mxu0 0
        %576 = vmatpush1.bf16.msra.mxu0 0
        %577 = vmatprep.subr.bf16.mxu0 0
        %578 = vmatpush1.bf16.msra.mxu0 0
        %579 = vmatprep.subr.bf16.mxu0 0
        %580 = vmatpush1.bf16.msra.mxu0 0
        %581 = vmatprep.subr.bf16.mxu0 0
        %582 = vmatpush1.bf16.msra.mxu0 0
        %583 = vmatprep.subr.bf16.mxu0 0
        %584 = vmatpush1.bf16.msra.mxu0 0
        %585 = vmatprep.subr.bf16.mxu0 0
        %586 = vmatpush1.bf16.msra.mxu0 0
        %587 = vmatprep.subr.bf16.mxu0 0
        %588 = vmatpush1.bf16.msra.mxu0 0
        %589 = vmatprep.subr.bf16.mxu0 0
        %590 = vmatpush1.bf16.msra.mxu0 0
        %591 = vmatprep.subr.bf16.mxu0 0
        %592 = vmatpush1.bf16.msra.mxu0 0
        %593 = vmatprep.subr.bf16.mxu0 0
        %594 = vmatpush1.bf16.msra.mxu0 0
        %595 = vmatprep.subr.bf16.mxu0 0
        %596 = vmatpush1.bf16.msra.mxu0 0
        %597 = vmatprep.subr.bf16.mxu0 0
        %598 = vmatpush1.bf16.msra.mxu0 0
        %599 = vmatprep.mubr.bf16.mxu0 0
        %600 = vmatmul.mubr.bf16.gmra.mrb[0].mxu0 %v559
        %v601 = vpop.f32.mrb[0].mxu0
        %v602 = vadd.f32 0.0, %v601
        %v603 = vpop.f32.mrb[0].mxu0
        %v604 = vadd.f32 0.0, %v603
        %v605 = vpop.f32.mrb[0].mxu0
        %v606 = vpop.f32.mrb[0].mxu0
        %607 = vdwg.mxu0
        %v608 = vadd.f32 %v543, %v602
        %v609 = vadd.f32 %v544, %v604
        %610 = vrot.lane.b32.xlu0 %v276, 127
        %v611 = vpop.permute.xlu0 %610
        %612 = vrot.lane.b32.xlu0 %v277, 127
        %v613 = vpop.permute.xlu0 %612
        %vm614 = vcmp.lt.s32.totalorder %v279, 127
        %v615 = vsel %vm614, %v611, %v613
        %v616 = vsel %vm614, %v613, %v611
        %v617 = vsel %vm476, %v615, 0.0
        %v618 = vsel %vm477, %v616, 0.0
        %s619 = scalar_lea.vmem %s2, 20
        %v620 = vld [vmem:[%s619] sm:$0xf]
        %v621 = vpack.c.bf16 %v617, %v617
        %v622 = vpack.c.bf16 %v618, %v618
        %v624 = vsel %vm309, %v620, 0
        %v627 = vsel %vm313, %v621, 0
        %v630 = vsel %vm313, %v622, 0
        %632 = vmatprep.subr.bf16.mxu0 %v630
        %633 = vmatpush1.bf16.msra.mxu0 %v627
        %634 = vmatprep.subr.bf16.mxu0 0
        %635 = vmatpush1.bf16.msra.mxu0 0
        %636 = vmatprep.subr.bf16.mxu0 0
        %637 = vmatpush1.bf16.msra.mxu0 0
        %638 = vmatprep.subr.bf16.mxu0 0
        %639 = vmatpush1.bf16.msra.mxu0 0
        %640 = vmatprep.subr.bf16.mxu0 0
        %641 = vmatpush1.bf16.msra.mxu0 0
        %642 = vmatprep.subr.bf16.mxu0 0
        %643 = vmatpush1.bf16.msra.mxu0 0
        %644 = vmatprep.subr.bf16.mxu0 0
        %645 = vmatpush1.bf16.msra.mxu0 0
        %646 = vmatprep.subr.bf16.mxu0 0
        %647 = vmatpush1.bf16.msra.mxu0 0
        %648 = vmatprep.subr.bf16.mxu0 0
        %649 = vmatpush1.bf16.msra.mxu0 0
        %650 = vmatprep.subr.bf16.mxu0 0
        %651 = vmatpush1.bf16.msra.mxu0 0
        %652 = vmatprep.subr.bf16.mxu0 0
        %653 = vmatpush1.bf16.msra.mxu0 0
        %654 = vmatprep.subr.bf16.mxu0 0
        %655 = vmatpush1.bf16.msra.mxu0 0
        %656 = vmatprep.subr.bf16.mxu0 0
        %657 = vmatpush1.bf16.msra.mxu0 0
        %658 = vmatprep.subr.bf16.mxu0 0
        %659 = vmatpush1.bf16.msra.mxu0 0
        %660 = vmatprep.subr.bf16.mxu0 0
        %661 = vmatpush1.bf16.msra.mxu0 0
        %662 = vmatprep.subr.bf16.mxu0 0
        %663 = vmatpush1.bf16.msra.mxu0 0
        %664 = vmatprep.mubr.bf16.mxu0 0
        %665 = vmatmul.mubr.bf16.gmra.mrb[0].mxu0 %v624
        %v666 = vpop.f32.mrb[0].mxu0
        %v667 = vadd.f32 0.0, %v666
        %v668 = vpop.f32.mrb[0].mxu0
        %v669 = vadd.f32 0.0, %v668
        %v670 = vpop.f32.mrb[0].mxu0
        %v671 = vpop.f32.mrb[0].mxu0
        %672 = vdwg.mxu0
        %v673 = vadd.f32 %v608, %v667
        %v674 = vadd.f32 %v609, %v669
        %vm675 = vcmp.le.s32.totalorder %v285, 14
        %vm676 = vcmp.le.s32.totalorder %v286, 14
        %vm677 = vmand %vm675, %vm293
        %vm678 = vmand %vm676, %vm294
        %679 = vrot.lane.b32.xlu0 %v276, 113
        %v680 = vpop.permute.xlu0 %679
        %681 = vrot.lane.b32.xlu0 %v277, 113
        %v682 = vpop.permute.xlu0 %681
        %vm683 = vcmp.lt.s32.totalorder %v279, 113
        %v684 = vsel %vm683, %v680, %v682
        %v685 = vsel %vm683, %v682, %v680
        %v686 = vsel %vm677, %v684, 0.0
        %v687 = vsel %vm678, %v685, 0.0
        %s688 = scalar_lea.vmem %s2, 24
        %v689 = vld [vmem:[%s688] sm:$0xf]
        %v690 = vpack.c.bf16 %v686, %v686
        %v691 = vpack.c.bf16 %v687, %v687
        %v693 = vsel %vm309, %v689, 0
        %v696 = vsel %vm313, %v690, 0
        %v699 = vsel %vm313, %v691, 0
        %701 = vmatprep.subr.bf16.mxu0 %v699
        %702 = vmatpush1.bf16.msra.mxu0 %v696
        %703 = vmatprep.subr.bf16.mxu0 0
        %704 = vmatpush1.bf16.msra.mxu0 0
        %705 = vmatprep.subr.bf16.mxu0 0
        %706 = vmatpush1.bf16.msra.mxu0 0
        %707 = vmatprep.subr.bf16.mxu0 0
        %708 = vmatpush1.bf16.msra.mxu0 0
        %709 = vmatprep.subr.bf16.mxu0 0
        %710 = vmatpush1.bf16.msra.mxu0 0
        %711 = vmatprep.subr.bf16.mxu0 0
        %712 = vmatpush1.bf16.msra.mxu0 0
        %713 = vmatprep.subr.bf16.mxu0 0
        %714 = vmatpush1.bf16.msra.mxu0 0
        %715 = vmatprep.subr.bf16.mxu0 0
        %716 = vmatpush1.bf16.msra.mxu0 0
        %717 = vmatprep.subr.bf16.mxu0 0
        %718 = vmatpush1.bf16.msra.mxu0 0
        %719 = vmatprep.subr.bf16.mxu0 0
        %720 = vmatpush1.bf16.msra.mxu0 0
        %721 = vmatprep.subr.bf16.mxu0 0
        %722 = vmatpush1.bf16.msra.mxu0 0
        %723 = vmatprep.subr.bf16.mxu0 0
        %724 = vmatpush1.bf16.msra.mxu0 0
        %725 = vmatprep.subr.bf16.mxu0 0
        %726 = vmatpush1.bf16.msra.mxu0 0
        %727 = vmatprep.subr.bf16.mxu0 0
        %728 = vmatpush1.bf16.msra.mxu0 0
        %729 = vmatprep.subr.bf16.mxu0 0
        %730 = vmatpush1.bf16.msra.mxu0 0
        %731 = vmatprep.subr.bf16.mxu0 0
        %732 = vmatpush1.bf16.msra.mxu0 0
        %733 = vmatprep.mubr.bf16.mxu0 0
        %734 = vmatmul.mubr.bf16.gmra.mrb[0].mxu0 %v693
        %v735 = vpop.f32.mrb[0].mxu0
        %v736 = vadd.f32 0.0, %v735
        %v737 = vpop.f32.mrb[0].mxu0
        %v738 = vadd.f32 0.0, %v737
        %v739 = vpop.f32.mrb[0].mxu0
        %v740 = vpop.f32.mrb[0].mxu0
        %741 = vdwg.mxu0
        %v742 = vadd.f32 %v673, %v736
        %v743 = vadd.f32 %v674, %v738
        %744 = vrot.lane.b32.xlu0 %v276, 112
        %v745 = vpop.permute.xlu0 %744
        %746 = vrot.lane.b32.xlu0 %v277, 112
        %v747 = vpop.permute.xlu0 %746
        %vm748 = vcmp.lt.s32.totalorder %v279, 112
        %v749 = vsel %vm748, %v745, %v747
        %v750 = vsel %vm748, %v747, %v745
        %v751 = vsel %vm675, %v749, 0.0
        %v752 = vsel %vm676, %v750, 0.0
        %s753 = scalar_lea.vmem %s2, 28
        %v754 = vld [vmem:[%s753] sm:$0xf]
        %v755 = vpack.c.bf16 %v751, %v751
        %v756 = vpack.c.bf16 %v752, %v752
        %v758 = vsel %vm309, %v754, 0
        %v761 = vsel %vm313, %v755, 0
        %v764 = vsel %vm313, %v756, 0
        %766 = vmatprep.subr.bf16.mxu0 %v764
        %767 = vmatpush1.bf16.msra.mxu0 %v761
        %768 = vmatprep.subr.bf16.mxu0 0
        %769 = vmatpush1.bf16.msra.mxu0 0
        %770 = vmatprep.subr.bf16.mxu0 0
        %771 = vmatpush1.bf16.msra.mxu0 0
        %772 = vmatprep.subr.bf16.mxu0 0
        %773 = vmatpush1.bf16.msra.mxu0 0
        %774 = vmatprep.subr.bf16.mxu0 0
        %775 = vmatpush1.bf16.msra.mxu0 0
        %776 = vmatprep.subr.bf16.mxu0 0
        %777 = vmatpush1.bf16.msra.mxu0 0
        %778 = vmatprep.subr.bf16.mxu0 0
        %779 = vmatpush1.bf16.msra.mxu0 0
        %780 = vmatprep.subr.bf16.mxu0 0
        %781 = vmatpush1.bf16.msra.mxu0 0
        %782 = vmatprep.subr.bf16.mxu0 0
        %783 = vmatpush1.bf16.msra.mxu0 0
        %784 = vmatprep.subr.bf16.mxu0 0
        %785 = vmatpush1.bf16.msra.mxu0 0
        %786 = vmatprep.subr.bf16.mxu0 0
        %787 = vmatpush1.bf16.msra.mxu0 0
        %788 = vmatprep.subr.bf16.mxu0 0
        %789 = vmatpush1.bf16.msra.mxu0 0
        %790 = vmatprep.subr.bf16.mxu0 0
        %791 = vmatpush1.bf16.msra.mxu0 0
        %792 = vmatprep.subr.bf16.mxu0 0
        %793 = vmatpush1.bf16.msra.mxu0 0
        %794 = vmatprep.subr.bf16.mxu0 0
        %795 = vmatpush1.bf16.msra.mxu0 0
        %796 = vmatprep.subr.bf16.mxu0 0
        %797 = vmatpush1.bf16.msra.mxu0 0
        %798 = vmatprep.mubr.bf16.mxu0 0
        %799 = vmatmul.mubr.bf16.gmra.mrb[0].mxu0 %v758
        %v800 = vpop.f32.mrb[0].mxu0
        %v801 = vadd.f32 0.0, %v800
        %v802 = vpop.f32.mrb[0].mxu0
        %v803 = vadd.f32 0.0, %v802
        %v804 = vpop.f32.mrb[0].mxu0
        %v805 = vpop.f32.mrb[0].mxu0
        %806 = vdwg.mxu0
        %v807 = vadd.f32 %v742, %v801
        %v808 = vadd.f32 %v743, %v803
        %vm809 = vmand %vm675, %vm476
        %vm810 = vmand %vm676, %vm477
        %811 = vrot.lane.b32.xlu0 %v276, 111
        %v812 = vpop.permute.xlu0 %811
        %813 = vrot.lane.b32.xlu0 %v277, 111
        %v814 = vpop.permute.xlu0 %813
        %vm815 = vcmp.lt.s32.totalorder %v279, 111
        %v816 = vsel %vm815, %v812, %v814
        %v817 = vsel %vm815, %v814, %v812
        %v818 = vsel %vm809, %v816, 0.0
        %v819 = vsel %vm810, %v817, 0.0
        %s820 = scalar_lea.vmem %s2, 32
        %v821 = vld [vmem:[%s820] sm:$0xf]
        %v822 = vpack.c.bf16 %v818, %v818
        %v823 = vpack.c.bf16 %v819, %v819
        %v825 = vsel %vm309, %v821, 0
        %v828 = vsel %vm313, %v822, 0
        %v831 = vsel %vm313, %v823, 0
        %833 = vmatprep.subr.bf16.mxu0 %v831
        %834 = vmatpush1.bf16.msra.mxu0 %v828
        %835 = vmatprep.subr.bf16.mxu0 0
        %836 = vmatpush1.bf16.msra.mxu0 0
        %837 = vmatprep.subr.bf16.mxu0 0
        %838 = vmatpush1.bf16.msra.mxu0 0
        %839 = vmatprep.subr.bf16.mxu0 0
        %840 = vmatpush1.bf16.msra.mxu0 0
        %841 = vmatprep.subr.bf16.mxu0 0
        %842 = vmatpush1.bf16.msra.mxu0 0
        %843 = vmatprep.subr.bf16.mxu0 0
        %844 = vmatpush1.bf16.msra.mxu0 0
        %845 = vmatprep.subr.bf16.mxu0 0
        %846 = vmatpush1.bf16.msra.mxu0 0
        %847 = vmatprep.subr.bf16.mxu0 0
        %848 = vmatpush1.bf16.msra.mxu0 0
        %849 = vmatprep.subr.bf16.mxu0 0
        %850 = vmatpush1.bf16.msra.mxu0 0
        %851 = vmatprep.subr.bf16.mxu0 0
        %852 = vmatpush1.bf16.msra.mxu0 0
        %853 = vmatprep.subr.bf16.mxu0 0
        %854 = vmatpush1.bf16.msra.mxu0 0
        %855 = vmatprep.subr.bf16.mxu0 0
        %856 = vmatpush1.bf16.msra.mxu0 0
        %857 = vmatprep.subr.bf16.mxu0 0
        %858 = vmatpush1.bf16.msra.mxu0 0
        %859 = vmatprep.subr.bf16.mxu0 0
        %860 = vmatpush1.bf16.msra.mxu0 0
        %861 = vmatprep.subr.bf16.mxu0 0
        %862 = vmatpush1.bf16.msra.mxu0 0
        %863 = vmatprep.subr.bf16.mxu0 0
        %864 = vmatpush1.bf16.msra.mxu0 0
        %865 = vmatprep.mubr.bf16.mxu0 0
        %866 = vmatmul.mubr.bf16.gmra.mrb[0].mxu0 %v825
        %v867 = vpop.f32.mrb[0].mxu0
        %v868 = vadd.f32 0.0, %v867
        %v869 = vpop.f32.mrb[0].mxu0
        %v870 = vadd.f32 0.0, %v869
        %v871 = vpop.f32.mrb[0].mxu0
        %v872 = vpop.f32.mrb[0].mxu0
        %873 = vdwg.mxu0
        %v874 = vadd.f32 %v807, %v868
        %v875 = vadd.f32 %v808, %v870
        %v876 = vadd.f32 %v874, %v875
        %877 = vadd.xlane.f32.xlu0 %v876
        %v878 = vpop.xlane.xlu0 %877
        %v879 = vmul.f32 %v878, %v262
        %v880 = vsub.f32 %v874, %v879
        %v881 = vsub.f32 %v875, %v879
        %v882 = vmul.f32 %v880, %v880
        %v883 = vmul.f32 %v881, %v881
        %v884 = vadd.f32 %v882, %v883
        %885 = vadd.xlane.f32.xlu0 %v884
        %v886 = vpop.xlane.xlu0 %885
        %v887 = vmul.f32 %v886, %v262
        %v888 = vadd.f32 %v887, 1e-05
        %v889 = vrsqrt.pop %v888
        %v890 = vmul.f32 %v880, %v889
        %v891 = vmul.f32 %v881, %v889
        %v892 = vmax.f32 %v890, 0.0
        %v893 = vmax.f32 %v891, 0.0
        %v894 = vld [vmem:[%s3] sm:$0x3]
        %v895 = vpack.c.bf16 %v892, %v892
        %v896 = vpack.c.bf16 %v893, %v893
        %v898 = vsel %vm309, %v894, 0
        %v901 = vsel %vm313, %v895, 0
        %v904 = vsel %vm313, %v896, 0
        %906 = vmatprep.subr.bf16.mxu0 %v904
        %907 = vmatpush1.bf16.msra.mxu0 %v901
        %908 = vmatprep.subr.bf16.mxu0 0
        %909 = vmatpush1.bf16.msra.mxu0 0
        %910 = vmatprep.subr.bf16.mxu0 0
        %911 = vmatpush1.bf16.msra.mxu0 0
        %912 = vmatprep.subr.bf16.mxu0 0
        %913 = vmatpush1.bf16.msra.mxu0 0
        %914 = vmatprep.subr.bf16.mxu0 0
        %915 = vmatpush1.bf16.msra.mxu0 0
        %916 = vmatprep.subr.bf16.mxu0 0
        %917 = vmatpush1.bf16.msra.mxu0 0
        %918 = vmatprep.subr.bf16.mxu0 0
        %919 = vmatpush1.bf16.msra.mxu0 0
        %920 = vmatprep.subr.bf16.mxu0 0
        %921 = vmatpush1.bf16.msra.mxu0 0
        %922 = vmatprep.subr.bf16.mxu0 0
        %923 = vmatpush1.bf16.msra.mxu0 0
        %924 = vmatprep.subr.bf16.mxu0 0
        %925 = vmatpush1.bf16.msra.mxu0 0
        %926 = vmatprep.subr.bf16.mxu0 0
        %927 = vmatpush1.bf16.msra.mxu0 0
        %928 = vmatprep.subr.bf16.mxu0 0
        %929 = vmatpush1.bf16.msra.mxu0 0
        %930 = vmatprep.subr.bf16.mxu0 0
        %931 = vmatpush1.bf16.msra.mxu0 0
        %932 = vmatprep.subr.bf16.mxu0 0
        %933 = vmatpush1.bf16.msra.mxu0 0
        %934 = vmatprep.subr.bf16.mxu0 0
        %935 = vmatpush1.bf16.msra.mxu0 0
        %936 = vmatprep.subr.bf16.mxu0 0
        %937 = vmatpush1.bf16.msra.mxu0 0
        %938 = vmatprep.mubr.bf16.mxu0 0
        %939 = vmatmul.mubr.bf16.gmra.mrb[0].mxu0 %v898
        %v940 = vpop.f32.mrb[0].mxu0
        %v941 = vadd.f32 0.0, %v940
        %v942 = vpop.f32.mrb[0].mxu0
        %v943 = vadd.f32 0.0, %v942
        %v944 = vpop.f32.mrb[0].mxu0
        %v945 = vpop.f32.mrb[0].mxu0
        %946 = vdwg.mxu0
        %v947 = vsel %vm313, %v941, 0.0
        %v948 = vsel %vm313, %v943, 0.0
        %v949 = vadd.f32 %v947, %v948
        %950 = vadd.xlane.f32.xlu0 %v949
        %v951 = vpop.xlane.xlu0 %950
        %v952 = vmul.f32 %v951, %v262
        %v953 = vsub.f32 %v941, %v952
        %v954 = vsub.f32 %v943, %v952
        %v955 = vmul.f32 %v953, %v953
        %v956 = vmul.f32 %v954, %v954
        %v957 = vsel %vm313, %v955, 0.0
        %v958 = vsel %vm313, %v956, 0.0
        %v959 = vadd.f32 %v957, %v958
        %960 = vadd.xlane.f32.xlu0 %v959
        %v961 = vpop.xlane.xlu0 %960
        %v962 = vmul.f32 %v961, %v262
        %v963 = vadd.f32 %v962, 1e-05
        %v964 = vrsqrt.pop %v963
        %v965 = vmul.f32 %v953, %v964
        %v966 = vmul.f32 %v954, %v964
        %v967 = vadd.f32 %v965, %v200
        %v968 = vadd.f32 %v966, %v203
        %v969 = vmax.f32 %v967, 0.0
        %v970 = vmax.f32 %v968, 0.0
        %v973 = vcombine.low %v969, %v970
        %975 = vst [vmem:[%s191] sm:$0xff] %v973
        %s976 = sand.u32 %s115, 1
        %s977 = scalar_lea.sflag [#allocation3], %s976
        %s978 = sand.u32 %s115, 1
        %s979 = smul.addr %s978, 8
        %s980 = scalar_lea.vmem [#allocation2], %s979
        // Predicated region
        $region37: #{tpu_custom_call.1} parent=35 // pred_check
          %p981 = pneg %p125
        $region38: #{tpu_custom_call.1} parent=35 // pred_check_branch
          %983 = sbr.rel (%p981) target = $region40
        $region39: #{tpu_custom_call.1} parent=35 // pred_region
          %s984 = smul.u32 2, %s18
          %s986 = ssub.s32 128, 128
          %987 = vsyncadd %s977, %s986
          %s988 = smul.addr %s984, 64
          %s989 = scalar_lea.hbm %s4, %s988
          %s991 = sshll.u32 %s980, 4
          %s992 = int_to_ptr.vmem [resolvable:$true] %s991
          %994 = dma.vmem_to_hbm [thread:$0]  %s992, 128, %s989, %s977
        $region40: #{tpu_custom_call.1} parent=35 // pred_fallthru
          _
      $region36: #{tpu_custom_call.1} parent=5 // pred_fallthru
        _
      %p995 = scmp.le.s32.totalorder 2, %s13
      // Predicated region
      $region41: #{tpu_custom_call.1} parent=5 // pred_check
        %p996 = pneg %p995
      $region42: #{tpu_custom_call.1} parent=5 // pred_check_branch
        %998 = sbr.rel (%p996) target = $region44
      $region43: #{tpu_custom_call.1} parent=5 // pred_region
        %s999 = ssub.s32 %s13, 2
        // Predicated region
        $region45: #{tpu_custom_call.1} parent=43 // pred_check
          %p1000 = pneg %p131
        $region46: #{tpu_custom_call.1} parent=43 // pred_check_branch
          %1002 = sbr.rel (%p1000) target = $region48
        $region47: #{tpu_custom_call.1} parent=43 // pred_region
          %s1003 = sand.u32 %s116, 1
          %s1004 = scalar_lea.sflag [#allocation3], %s1003
          %s1005 = sand.u32 %s116, 1
          %s1006 = smul.addr %s1005, 8
          %s1007 = scalar_lea.vmem [#allocation2], %s1006
          %1008 = dma.done %s1004, 128
        $region48: #{tpu_custom_call.1} parent=43 // pred_fallthru
          _
      $region44: #{tpu_custom_call.1} parent=5 // pred_fallthru
        _
    $region6: #{tpu_custom_call.1} parent=1 // loop_footer
      %s17 = sadd.s32 1, %s13
    $region7: #{tpu_custom_call.1} parent=1 // loop_footer_branch
      %12 = sbr.rel target = $region3
    $region8: #{tpu_custom_call.1} parent=1 // loop_exit
      _
    %1009 = vsyncpa [#allocation3], 1
    %s1010 = scalar_lea.sflag [#allocation3], 1
    %1011 = vsyncpa %s1010, 1

</llo_original>
